<compile_context>
chip_gen: v5e
topology: v5e:2x2
jax: 0.10.0
libtpu: 0.0.40
codegen_flags: <defaults>
</compile_context>

<pallas_src>
import functools

import jax
import jax.numpy as jnp
from jax import lax
from jax.experimental import pallas as pl
from jax.experimental.pallas import tpu as pltpu


def _mean_pool_kernel(x_ref, o_ref, acc_ref, *, inv_t, t_total, tt, needs_mask):
    # x_ref:   (tb, tt, td) input tile
    # o_ref:   (tb, td) output tile (resident across the trailing T grid axis)
    # acc_ref: (tb, td) f32 accumulator scratch
    t = pl.program_id(2)

    @pl.when(t == 0)
    def _():
        acc_ref[...] = jnp.zeros_like(acc_ref)

    x = x_ref[...].astype(jnp.float32)
    if needs_mask:
        # Last T tile may run past the true sequence length: zero the
        # out-of-bounds rows (their contents are unspecified) before summing.
        pos = t * tt + lax.broadcasted_iota(jnp.int32, x_ref.shape, 1)
        x = jnp.where(pos < t_total, x, 0.0)
    acc_ref[...] += jnp.sum(x, axis=1)

    @pl.when(t == pl.num_programs(2) - 1)
    def _():
        o_ref[...] = (acc_ref[...] * jnp.float32(inv_t)).astype(o_ref.dtype)


def mean_pooling(xs, *, target_block_bytes=4 << 20):
    """xs: (B, T, D) -> (B, D); mean over the T axis (== torch.mean(xs, dim=1)).

    target_block_bytes: per-buffer input block budget. ~4 MiB is a good
    cross-generation default (v7x benefits from 4-8 MiB, v6e 2-4 MiB, v5e is
    fine at 1-4 MiB since vmem_limit_bytes is raised explicitly below).
    """
    B, T, D = xs.shape
    itemsize = jnp.dtype(xs.dtype).itemsize

    # ---- tile sizing -------------------------------------------------------
    # Sublane packing for this dtype: 8 rows (f32), 16 (bf16), 32 (int8/fp8).
    sub = max(8, 32 // itemsize)

    # Batch tile: keep it at the sublane minimum (dense output stores, longer
    # contiguous DMA runs spent on tt instead); fall back to the full batch
    # dim when B is not sublane-aligned (always a legal block, no padding).
    tb = sub if (B % sub == 0) else B

    # Feature tile: full D unless D is a large multiple of 128, in which case
    # tile it (bounds VMEM for huge D and adds a parallel axis for v7x's 2 TCs).
    if D % 128 == 0 and D > 512:
        td = 512
        while D % td != 0:
            td -= 128
    else:
        td = D

    # T tile: fill the block budget, multiple of the sublane pack, else full T.
    tt_budget = max(1, target_block_bytes // (tb * td * itemsize))
    tt = max(sub, (tt_budget // sub) * sub)
    if tt >= T:
        tt = T  # full dim: always legal, single reduction step, no masking
    grid_t = pl.cdiv(T, tt)
    needs_mask = (T % tt) != 0

    grid = (pl.cdiv(B, tb), pl.cdiv(D, td), grid_t)

    # ---- VMEM budget -------------------------------------------------------
    block_bytes = tb * tt * td * itemsize
    acc_bytes = tb * td * 4
    out_bytes = tb * td * itemsize
    vmem_limit = 2 * block_bytes + acc_bytes + 2 * out_bytes + (4 << 20)
    vmem_limit = int(min(max(vmem_limit, 32 << 20), 48 << 20))  # <= v7x physical

    kernel = functools.partial(
        _mean_pool_kernel,
        inv_t=1.0 / T,
        t_total=T,
        tt=tt,
        needs_mask=needs_mask,
    )

    return pl.pallas_call(
        kernel,
        out_shape=jax.ShapeDtypeStruct((B, D), xs.dtype),
        grid_spec=pltpu.PrefetchScalarGridSpec(
            num_scalar_prefetch=0,
            grid=grid,
            in_specs=[pl.BlockSpec((tb, tt, td), lambda i, j, t: (i, t, j))],
            out_specs=pl.BlockSpec((tb, td), lambda i, j, t: (i, j)),
            scratch_shapes=[pltpu.VMEM((tb, td), jnp.float32)],
        ),
        compiler_params=pltpu.CompilerParams(
            dimension_semantics=("parallel", "parallel", "arbitrary"),
            vmem_limit_bytes=vmem_limit,
        ),
        cost_estimate=pl.CostEstimate(
            flops=B * T * D,
            transcendentals=0,
            bytes_accessed=B * T * D * itemsize + B * D * itemsize,
        ),
    )(xs)


if __name__ == "__main__":
    key = jax.random.PRNGKey(0)

    # 1) Small, aligned-ish shapes matching the module's (batch, T, feat_dim).
    B, T, D = 2, 8, 32
    xs = jax.random.normal(key, (B, T, D), dtype=jnp.float32)
    out = jax.block_until_ready(mean_pooling(xs))
    ref = jnp.mean(xs, axis=1)
    assert out.shape == (B, D), out.shape
    assert jnp.allclose(out, ref, atol=1e-5, rtol=1e-5), "mismatch (aligned case)"

    # 2) Non-multiple B and T, single full-T tile (no masking needed).
    B2, T2, D2 = 3, 13, 32
    xs2 = jax.random.normal(jax.random.PRNGKey(1), (B2, T2, D2), dtype=jnp.float32)
    out2 = jax.block_until_ready(mean_pooling(xs2))
    ref2 = jnp.mean(xs2, axis=1)
    assert out2.shape == (B2, D2), out2.shape
    assert jnp.allclose(out2, ref2, atol=1e-5, rtol=1e-5), "mismatch (odd shapes)"

    # 3) Force a small T tile so the multi-step accumulation + in-kernel
    #    T-tail masking path is exercised (T=37, tt=8 -> last tile is partial).
    B3, T3, D3 = 5, 37, 32
    xs3 = jax.random.normal(jax.random.PRNGKey(2), (B3, T3, D3), dtype=jnp.float32)
    out3 = jax.block_until_ready(mean_pooling(xs3, target_block_bytes=4096))
    ref3 = jnp.mean(xs3, axis=1)
    assert out3.shape == (B3, D3), out3.shape
    assert jnp.allclose(out3, ref3, atol=1e-5, rtol=1e-5), "mismatch (masked T tail)"

    # 4) bf16 input: exercises dtype-aware sublane packing (tb=16) + f32 accum.
    B4, T4, D4 = 16, 40, 128
    xs4 = jax.random.normal(jax.random.PRNGKey(3), (B4, T4, D4), dtype=jnp.bfloat16)
    out4 = jax.block_until_ready(mean_pooling(xs4))
    ref4 = jnp.mean(xs4.astype(jnp.float32), axis=1)
    assert out4.shape == (B4, D4), out4.shape
    assert jnp.allclose(out4.astype(jnp.float32), ref4, atol=1e-2, rtol=1e-2), \
        "mismatch (bf16)"

    print("KERNEL_OK")
</pallas_src>

<mosaic_0001>
module attributes {stable_mosaic.version = 11 : i64} {
  func.func @_mean_pool_kernel(%arg0: i32, %arg1: i32, %arg2: i32, %arg3: memref<2x8x32xf32, #tpu.memory_space<vmem>>, %arg4: memref<2x32xf32, #tpu.memory_space<vmem>>, %arg5: memref<2x32xf32, #tpu.memory_space<vmem>>) attributes {dimension_semantics = [#tpu.dimension_semantics<parallel>, #tpu.dimension_semantics<parallel>, #tpu.dimension_semantics<arbitrary>], iteration_bounds = array<i64: 1, 1, 1>, scalar_prefetch = 0 : i64, scratch_operands = 1 : i64, tpu.core_type = #tpu.core_type<tc>, window_params = [{transform_indices = @transform_0, window_bounds = array<i64: 2, 8, 32>}, {transform_indices = @transform_1, window_bounds = array<i64: 2, 32>}]} {
    %c0_i32 = arith.constant 0 : i32
    %0 = arith.cmpi eq, %arg2, %c0_i32 : i32
    %1 = arith.extui %0 : i1 to i32
    %c0_i32_0 = arith.constant 0 : i32
    %2 = arith.cmpi ne, %1, %c0_i32_0 : i32
    scf.if %2 {
      %cst_9 = arith.constant 0.000000e+00 : f32
      %11 = vector.broadcast %cst_9 : f32 to vector<2x32xf32>
      %c0_10 = arith.constant 0 : index
      %c0_11 = arith.constant 0 : index
      %12 = vector.load %arg5[%c0_10, %c0_11] : memref<2x32xf32, #tpu.memory_space<vmem>>, vector<2x32xf32>
      tpu.vector_store %arg5[%c0_10, %c0_11], %11 {strides = array<i32>} : memref<2x32xf32, #tpu.memory_space<vmem>>, vector<2x32xf32>,
    } else {
    }
    %c0 = arith.constant 0 : index
    %c0_1 = arith.constant 0 : index
    %c0_2 = arith.constant 0 : index
    %3 = vector.load %arg3[%c0, %c0_1, %c0_2] : memref<2x8x32xf32, #tpu.memory_space<vmem>>, vector<2x8x32xf32>
    %c0_3 = arith.constant 0 : index
    %c0_4 = arith.constant 0 : index
    %4 = vector.load %arg5[%c0_3, %c0_4] : memref<2x32xf32, #tpu.memory_space<vmem>>, vector<2x32xf32>
    %cst = arith.constant dense<0.000000e+00> : vector<2x32xf32>
    %5 = vector.multi_reduction <add>, %3, %cst [1] : vector<2x8x32xf32> to vector<2x32xf32>
    %6 = arith.addf %4, %5 : vector<2x32xf32>
    %c0_5 = arith.constant 0 : index
    %c0_6 = arith.constant 0 : index
    %7 = vector.load %arg5[%c0_5, %c0_6] : memref<2x32xf32, #tpu.memory_space<vmem>>, vector<2x32xf32>
    tpu.vector_store %arg5[%c0_5, %c0_6], %6 {strides = array<i32>} : memref<2x32xf32, #tpu.memory_space<vmem>>, vector<2x32xf32>,
    %c0_i32_7 = arith.constant 0 : i32
    %8 = arith.cmpi eq, %arg2, %c0_i32_7 : i32
    %9 = arith.extui %8 : i1 to i32
    %c0_i32_8 = arith.constant 0 : i32
    %10 = arith.cmpi ne, %9, %c0_i32_8 : i32
    scf.if %10 {
      %c0_9 = arith.constant 0 : index
      %c0_10 = arith.constant 0 : index
      %11 = vector.load %arg5[%c0_9, %c0_10] : memref<2x32xf32, #tpu.memory_space<vmem>>, vector<2x32xf32>
      %cst_11 = arith.constant 1.250000e-01 : f32
      %12 = vector.broadcast %cst_11 : f32 to vector<2x32xf32>
      %13 = arith.mulf %11, %12 : vector<2x32xf32>
      %c0_12 = arith.constant 0 : index
      %c0_13 = arith.constant 0 : index
      %14 = vector.load %arg4[%c0_12, %c0_13] : memref<2x32xf32, #tpu.memory_space<vmem>>, vector<2x32xf32>
      tpu.vector_store %arg4[%c0_12, %c0_13], %13 {strides = array<i32>} : memref<2x32xf32, #tpu.memory_space<vmem>>, vector<2x32xf32>,
    } else {
    }
    return
  }
  func.func @transform_0(%arg0: i32, %arg1: i32, %arg2: i32) -> (i32, i32, i32) {
    %c0_i32 = arith.constant 0 : i32
    return %arg0, %arg2, %arg1 : i32, i32, i32
  }
  func.func @transform_1(%arg0: i32, %arg1: i32, %arg2: i32) -> (i32, i32) {
    %c0_i32 = arith.constant 0 : i32
    return %arg0, %arg1 : i32, i32
  }
}

</mosaic_0001>

<llo_original>
// kernel: tpu_custom_call.1
$region0: #{tpu_custom_call.1}
  #allocation0 [shape = 'u32[]', space=smem, size = 0x4, offset = 0x4, fixed_abs, tag = 'smem constant byte address 0x4 - core index']
  #allocation1 [shape = 'u32[72,128]{1,0:T(1,128)}', space=vmem, size = 0x9000, scoped, tag = 'internal scratch']
  #allocation2 [shape = 'f32[2,32]{1,0:T(2,128)}', space=vmem, size = 0x400, scoped, tag = 'scratch operand']
  %s0 = inlined_call_operand.hbm [shape: f32[2,8,32], index: 0, kind: input, shape index: {}]
  %s1 = inlined_call_operand.hbm [shape: f32[2,32], index: 1, kind: output, shape index: {}]
  %s2 = sld [smem:[#allocation0]]
  $region26: #{tpu_custom_call.1} parent=0
    _
  %s4 = ssub.s32 1, %s2
  %s5 = scalar_select 0, %s4, %s2
  $region1: #{tpu_custom_call.1} parent=0
    #allocation3 [shape = 'u8[8192]{0}', space=vmem, size = 0x2000, scoped, tag = 'input window, operand 0, single buffered']
    #allocation4 [shape = 's32[1]{0}', space=sflag, size = 0x4, scoped, tag = 'scoped memory for tpu_custom_call.1']
    #allocation5 [shape = 's32[1]{0}', space=sflag, size = 0x4, scoped, tag = 'scoped memory for tpu_custom_call.1']
    #allocation6 [shape = 'u8[1024]{0}', space=vmem, size = 0x400, scoped, tag = 'output window, operand 0, single buffered']
    %6 = vsyncpa [#allocation4], 0
    %7 = vsyncpa [#allocation5], 0
    // Predicated region
    $region2: #{tpu_custom_call.1} parent=1 // pred_check
      _
    $region3: #{tpu_custom_call.1} parent=1 // pred_check_branch
      %9 = sbr.rel (0) target = $region5
    $region4: #{tpu_custom_call.1} parent=1 // pred_region
      %11 = vsyncadd [#allocation4], 0
      %s12 = sshll.u32 %s0, 4
      %s13 = int_to_ptr.hbm [resolvable:$true] %s12
      %s14 = sshll.u32 [#allocation3], 4
      %s15 = int_to_ptr.vmem [resolvable:$true] %s14
      %20 = dma.hbm_to_vmem [thread:$0]  %s13, 256, %s15, [#allocation4], 128, 128, 8
    $region5: #{tpu_custom_call.1} parent=1 // pred_fallthru
      _
    // Predicated region
    $region6: #{tpu_custom_call.1} parent=1 // pred_check
      _
    $region7: #{tpu_custom_call.1} parent=1 // pred_check_branch
      %22 = sbr.rel (0) target = $region9
    $region8: #{tpu_custom_call.1} parent=1 // pred_region
      %24 = dma.done [#allocation4], 256
    $region9: #{tpu_custom_call.1} parent=1 // pred_fallthru
      _
    %p25 = scmp.eq.s32.totalorder 0, 0
    // Predicated region
    $region10: #{tpu_custom_call.1} parent=1 // pred_check
      %p26 = pneg %p25
    $region11: #{tpu_custom_call.1} parent=1 // pred_check_branch
      %28 = sbr.rel (%p26) target = $region13
    $region12: #{tpu_custom_call.1} parent=1 // pred_region
      %vm29 = vcmask 254976
      %30 = vst.msk [vmem:[#allocation2] sm:$0x3] %vm29, 0.0
    $region13: #{tpu_custom_call.1} parent=1 // pred_fallthru
      _
    %v31 = vld [vmem:[#allocation3] sm:$0xff]
    %v32 = vld [vmem:[#allocation3 + $0x8] sm:$0xff]
    %v33 = vld [vmem:[#allocation2] sm:$0x3]
    %vm34 = vcmask 261120
    %v35 = vsel %vm34, %v31, 0.0
    %v36 = vrot.slane %v35, 4
    %v37 = vadd.f32 %v35, %v36
    %v38 = vrot.slane %v37, 2
    %v39 = vadd.f32 %v37, %v38
    %v40 = vrot.slane %v39, 1
    %v41 = vadd.f32 %v39, %v40
    %v42 = vsel %vm34, %v32, 0.0
    %v43 = vrot.slane %v42, 4
    %v44 = vadd.f32 %v42, %v43
    %v45 = vrot.slane %v44, 2
    %v46 = vadd.f32 %v44, %v45
    %v47 = vrot.slane %v46, 1
    %v48 = vadd.f32 %v46, %v47
    %vm51 = vcmask 1041409
    %v52 = vsel %vm51, %v48, %v41
    %v54 = vadd.f32 %v33, %v52
    %vm55 = vcmask 254976
    %56 = vst.msk [vmem:[#allocation2] sm:$0x3] %vm55, %v54
    // Predicated region
    $region14: #{tpu_custom_call.1} parent=1 // pred_check
      %p57 = pneg %p25
    $region15: #{tpu_custom_call.1} parent=1 // pred_check_branch
      %59 = sbr.rel (%p57) target = $region17
    $region16: #{tpu_custom_call.1} parent=1 // pred_region
      %v60 = vld [vmem:[#allocation2] sm:$0x3]
      %v61 = vmul.f32 %v60, 0.125
      %62 = vst.msk [vmem:[#allocation6] sm:$0x3] %vm55, %v61
    $region17: #{tpu_custom_call.1} parent=1 // pred_fallthru
      _
    // Predicated region
    $region18: #{tpu_custom_call.1} parent=1 // pred_check
      _
    $region19: #{tpu_custom_call.1} parent=1 // pred_check_branch
      %64 = sbr.rel (0) target = $region21
    $region20: #{tpu_custom_call.1} parent=1 // pred_region
      %66 = vsyncadd [#allocation5], 0
      %s68 = sshll.u32 [#allocation6], 4
      %s69 = int_to_ptr.vmem [resolvable:$true] %s68
      %s70 = sshll.u32 %s1, 4
      %s71 = int_to_ptr.hbm [resolvable:$true] %s70
      %73 = dma.vmem_to_hbm [thread:$0]  %s69, 32, %s71, [#allocation5]
    $region21: #{tpu_custom_call.1} parent=1 // pred_fallthru
      _
    // Predicated region
    $region22: #{tpu_custom_call.1} parent=1 // pred_check
      _
    $region23: #{tpu_custom_call.1} parent=1 // pred_check_branch
      %75 = sbr.rel (0) target = $region25
    $region24: #{tpu_custom_call.1} parent=1 // pred_region
      %77 = dma.done [#allocation5], 32
    $region25: #{tpu_custom_call.1} parent=1 // pred_fallthru
      _
    %78 = vsyncpa [#allocation4], 1
    %79 = vsyncpa [#allocation5], 1

</llo_original>
